<compile_context>
chip_gen: v7x
topology: tpu7x:2x2x1
jax: 0.10.0
libtpu: 0.0.40
codegen_flags: <defaults>
</compile_context>

<pallas_src>
import jax
import jax.numpy as jnp
import numpy as np
from jax.experimental import pallas as pl
from jax.experimental.pallas import tpu as pltpu

SCALE = 0.09
EPS = 1e-6


def _cos_linear_kernel(x_ref, w_ref, o_ref):
    x = x_ref[...]                                   # (B, K)  float32
    w = w_ref[...]                                   # (TN, K) float32

    # Per-row L2 norms; divides go to the EUP (approx reciprocal is ~1e-4 rel err,
    # far below the 1e-6 epsilon / test tolerance).
    inv_xn = pl.reciprocal(
        jnp.sqrt(jnp.sum(x * x, axis=-1, keepdims=True)) + EPS, approx=True)
    inv_wn = pl.reciprocal(
        jnp.sqrt(jnp.sum(w * w, axis=-1, keepdims=True)) + EPS, approx=True)

    xn = x * inv_xn                                  # (B, K)
    wn = w * inv_wn                                  # (TN, K)

    # Single MXU pass: contract K (last dim of both) -> (B, TN); lane-dense output.
    cos = jax.lax.dot_general(
        xn, wn, (((1,), (1,)), ((), ())), preferred_element_type=jnp.float32)

    o_ref[...] = (cos * (1.0 / SCALE)).astype(o_ref.dtype)


def cos_linear_forward(x, weight):
    """x: (B, indim) f32, weight: (outdim, indim) f32 -> scores (B, outdim) f32."""
    B, K = x.shape
    N, K2 = weight.shape
    assert K == K2, "weight must be (outdim, indim) with indim == x.shape[1]"

    # Tile the output dimension: lane-dense 128-wide tiles when possible, and a
    # parallel grid axis so v7x can shard tiles across its two TensorCores.
    TN = 128 if (N % 128 == 0) else N
    grid = (N // TN,)

    grid_spec = pltpu.PrefetchScalarGridSpec(
        num_scalar_prefetch=0,
        grid=grid,
        in_specs=[
            pl.BlockSpec((B, K), lambda j: (0, 0)),      # x: whole block each step
            pl.BlockSpec((TN, K), lambda j: (j, 0)),     # weight rows for this tile
        ],
        out_specs=pl.BlockSpec((B, TN), lambda j: (0, j)),
    )

    return pl.pallas_call(
        _cos_linear_kernel,
        out_shape=jax.ShapeDtypeStruct((B, N), jnp.float32),
        grid_spec=grid_spec,
        compiler_params=pltpu.CompilerParams(dimension_semantics=("parallel",)),
    )(x, weight)


if __name__ == "__main__":
    key = jax.random.PRNGKey(0)
    kx, kw = jax.random.split(key)

    B, K, N = 8, 128, 256          # batch, indim, outdim (lane-dense, 2 output tiles)

    x = jax.random.normal(kx, (B, K), jnp.float32)
    # nn.Linear(indim, outdim, bias=False) weight has shape (outdim, indim).
    weight = jax.random.normal(kw, (N, K), jnp.float32) * (1.0 / np.sqrt(K))

    fwd = jax.jit(cos_linear_forward)
    scores = fwd(x, weight)
    jax.block_until_ready(scores)

    # Pure-JAX reference of the torch forward.
    xn = x / (jnp.linalg.norm(x, axis=1, keepdims=True) + EPS)
    wn = weight / (jnp.linalg.norm(weight, axis=1, keepdims=True) + EPS)
    ref = (xn @ wn.T) / SCALE

    assert scores.shape == (B, N)
    assert np.allclose(np.asarray(scores), np.asarray(ref), rtol=1e-2, atol=1e-2)

    print("KERNEL_OK")
</pallas_src>

<mosaic_0001>
module attributes {stable_mosaic.version = 11 : i64} {
  func.func @_cos_linear_kernel(%arg0: i32, %arg1: memref<8x128xf32, #tpu.memory_space<vmem>>, %arg2: memref<128x128xf32, #tpu.memory_space<vmem>>, %arg3: memref<8x128xf32, #tpu.memory_space<vmem>>) attributes {dimension_semantics = [#tpu.dimension_semantics<parallel>], iteration_bounds = array<i64: 2>, scalar_prefetch = 0 : i64, scratch_operands = 0 : i64, tpu.core_type = #tpu.core_type<tc>, window_params = [{pipeline_mode = #tpu.pipeline_mode<synchronous>, transform_indices = @transform_0, window_bounds = array<i64: 8, 128>}, {transform_indices = @transform_1, window_bounds = array<i64: 128, 128>}, {transform_indices = @transform_2, window_bounds = array<i64: 8, 128>}]} {
    %c0 = arith.constant 0 : index
    %c0_0 = arith.constant 0 : index
    %0 = vector.load %arg1[%c0, %c0_0] : memref<8x128xf32, #tpu.memory_space<vmem>>, vector<8x128xf32>
    %c0_1 = arith.constant 0 : index
    %c0_2 = arith.constant 0 : index
    %1 = vector.load %arg2[%c0_1, %c0_2] : memref<128x128xf32, #tpu.memory_space<vmem>>, vector<128x128xf32>
    %2 = arith.mulf %0, %0 : vector<8x128xf32>
    %cst = arith.constant dense<0.000000e+00> : vector<8xf32>
    %3 = vector.multi_reduction <add>, %2, %cst [1] : vector<8x128xf32> to vector<8xf32>
    %4 = vector.shape_cast %3 : vector<8xf32> to vector<8x1xf32>
    %5 = math.sqrt %4 : vector<8x1xf32>
    %cst_3 = arith.constant 9.99999997E-7 : f32
    %6 = vector.broadcast %cst_3 : f32 to vector<8x1xf32>
    %7 = arith.addf %5, %6 : vector<8x1xf32>
    %8 = tpu.reciprocal %7 {approx = true} : vector<8x1xf32> -> vector<8x1xf32>
    %9 = arith.mulf %1, %1 : vector<128x128xf32>
    %cst_4 = arith.constant dense<0.000000e+00> : vector<128xf32>
    %10 = vector.multi_reduction <add>, %9, %cst_4 [1] : vector<128x128xf32> to vector<128xf32>
    %11 = vector.shape_cast %10 : vector<128xf32> to vector<128x1xf32>
    %12 = math.sqrt %11 : vector<128x1xf32>
    %cst_5 = arith.constant 9.99999997E-7 : f32
    %13 = vector.broadcast %cst_5 : f32 to vector<128x1xf32>
    %14 = arith.addf %12, %13 : vector<128x1xf32>
    %15 = tpu.reciprocal %14 {approx = true} : vector<128x1xf32> -> vector<128x1xf32>
    %16 = vector.broadcast %8 : vector<8x1xf32> to vector<8x128xf32>
    %17 = arith.mulf %0, %16 : vector<8x128xf32>
    %18 = vector.broadcast %15 : vector<128x1xf32> to vector<128x128xf32>
    %19 = arith.mulf %1, %18 : vector<128x128xf32>
    %cst_6 = arith.constant dense<0.000000e+00> : vector<8x128xf32>
    %20 = tpu.matmul %17, %19, %cst_6 {dimension_numbers = #tpu.dot_dimension_numbers<[1], [1], [0], [0], [0, 0, 1, 0], [], []>} : vector<8x128xf32>, vector<128x128xf32>, vector<8x128xf32> -> vector<8x128xf32>
    %cst_7 = arith.constant 11.1111107 : f32
    %21 = vector.broadcast %cst_7 : f32 to vector<8x128xf32>
    %22 = arith.mulf %20, %21 : vector<8x128xf32>
    %c0_8 = arith.constant 0 : index
    %c0_9 = arith.constant 0 : index
    %23 = vector.load %arg3[%c0_8, %c0_9] : memref<8x128xf32, #tpu.memory_space<vmem>>, vector<8x128xf32>
    tpu.vector_store %arg3[%c0_8, %c0_9], %22 {strides = array<i32>} : memref<8x128xf32, #tpu.memory_space<vmem>>, vector<8x128xf32>,
    return
  }
  func.func @transform_0(%arg0: i32) -> (i32, i32) {
    %c0_i32 = arith.constant 0 : i32
    %c0_i32_0 = arith.constant 0 : i32
    %c0_i32_1 = arith.constant 0 : i32
    return %c0_i32, %c0_i32_0 : i32, i32
  }
  func.func @transform_1(%arg0: i32) -> (i32, i32) {
    %c0_i32 = arith.constant 0 : i32
    %c0_i32_0 = arith.constant 0 : i32
    return %arg0, %c0_i32 : i32, i32
  }
  func.func @transform_2(%arg0: i32) -> (i32, i32) {
    %c0_i32 = arith.constant 0 : i32
    %c0_i32_0 = arith.constant 0 : i32
    return %c0_i32, %arg0 : i32, i32
  }
}

</mosaic_0001>

<llo_original>
// kernel: cos_linear_forward.1
$region0: #{cos_linear_forward.1}
  #allocation0 [shape = 'u32[]', space=smem, size = 0x4, offset = 0x4, fixed_abs, tag = 'smem constant byte address 0x4 - core index']
  #allocation1 [shape = 'u32[144,128]{1,0:T(1,128)}', space=vmem, size = 0x12000, scoped, tag = 'internal scratch']
  %s0 = inlined_call_operand.hbm [shape: f32[8,128], index: 0, kind: input, shape index: {}]
  %s1 = inlined_call_operand.hbm [shape: f32[256,128], index: 1, kind: input, shape index: {}]
  %s2 = inlined_call_operand.hbm [shape: f32[8,256], index: 2, kind: output, shape index: {}]
  %s3 = sld [smem:[#allocation0]]
  $region49: #{cos_linear_forward.1} parent=0
    _
  %s5 = ssub.s32 1, %s3
  %s6 = scalar_select 0, %s5, %s3
  $region1: #{cos_linear_forward.1} parent=0
    #allocation2 [shape = 'u8[4096]{0}', space=vmem, size = 0x1000, scoped, tag = 'input window, operand 0, single buffered']
    #allocation3 [shape = 's32[2]{0}', space=sflag, size = 0x8, scoped, tag = 'scoped memory for cos_linear_forward.1']
    #allocation4 [shape = 's32[2]{0}', space=sflag, size = 0x8, scoped, tag = 'scoped memory for cos_linear_forward.1']
    #allocation5 [shape = 'u8[131072]{0}', space=vmem, size = 0x20000, scoped, tag = 'input window, operand 1']
    #allocation6 [shape = 's32[2]{0}', space=sflag, size = 0x8, scoped, tag = 'scoped memory for cos_linear_forward.1']
    #allocation7 [shape = 'u8[8192]{0}', space=vmem, size = 0x2000, scoped, tag = 'output window, operand 0']
    %7 = vsyncpa [#allocation3], 0
    %8 = vsyncpa [#allocation6], 0
    %s9 = scalar_lea.sflag [#allocation6], 1
    %10 = vsyncpa %s9, 0
    %11 = vsyncpa [#allocation4], 0
    %s12 = scalar_lea.sflag [#allocation4], 1
    %13 = vsyncpa %s12, 0
    loop: start=0, step=1, limit=4
    $region2: #{cos_linear_forward.1} parent=1 // loop_pre_header
      _
    $region3: #{cos_linear_forward.1} parent=1 // loop_header
      %s15 = sphi 0, %s19
      %p16 = scmp.ge.s32.totalorder %s15, 4
      %s23 = sphi 0, %s23
      %s25 = sphi 0, %s23
      %s26 = sphi 0, %s25
      %s40 = sphi 0, %s26
      %s46 = sphi 0, %s48
      %s49 = sphi 0, %s46
      %s50 = sphi 0, %s49
      %s66 = sphi 0, %s50
      %s72 = sphi 0, %s74
      %s75 = sphi 0, %s72
      %s76 = sphi 0, %s75
      %s92 = sphi 0, %s76
    $region4: #{cos_linear_forward.1} parent=1 // loop_header_branch
      %18 = sbr.rel (%p16) target = $region8
    $region5: #{cos_linear_forward.1} parent=1 // loop_body
      %s20 = ssub.s32 %s15, 1
      %s21 = ssub.s32 %s15, 2
      %s22 = sadd.s32 %s15, 1
      %s24 = sadd.s32 %s23, 1
      %p27 = scmp.eq.s32.totalorder %s15, 1
      %p28 = scmp.ne.s32.totalorder %s23, %s25
      %p29 = scmp.eq.s32.totalorder %s15, 0
      %p30 = por %p28, %p29
      %p31 = scmp.ne.s32.totalorder %s23, %s25
      %p32 = scmp.eq.s32.totalorder %s20, 1
      %p33 = por %p31, %p32
      %p34 = scmp.ne.s32.totalorder %s25, %s26
      %p35 = scmp.eq.s32.totalorder %s20, 0
      %p36 = por %p34, %p35
      %p37 = scmp.ne.s32.totalorder %s25, %s26
      %p38 = scmp.eq.s32.totalorder %s21, 1
      %p39 = por %p37, %p38
      %p41 = scmp.ne.s32.totalorder %s26, %s40
      %p42 = scmp.eq.s32.totalorder %s21, 0
      %p43 = por %p41, %p42
      %s44 = ssub.s32 %s15, %s22
      %p45 = scmp.eq.s32.totalorder %s44, 0
      %s47 = sadd.s32 %s46, 1
      %s48 = scalar_select %p45, %s46, %s47
      %p51 = pneg %p45
      %p52 = scmp.eq.s32.totalorder %s15, 1
      %p53 = por %p51, %p52
      %p54 = scmp.ne.s32.totalorder %s46, %s49
      %p55 = scmp.eq.s32.totalorder %s15, 0
      %p56 = por %p54, %p55
      %p57 = scmp.ne.s32.totalorder %s46, %s49
      %p58 = scmp.eq.s32.totalorder %s20, 1
      %p59 = por %p57, %p58
      %p60 = scmp.ne.s32.totalorder %s49, %s50
      %p61 = scmp.eq.s32.totalorder %s20, 0
      %p62 = por %p60, %p61
      %p63 = scmp.ne.s32.totalorder %s49, %s50
      %p64 = scmp.eq.s32.totalorder %s21, 1
      %p65 = por %p63, %p64
      %p67 = scmp.ne.s32.totalorder %s50, %s66
      %p68 = scmp.eq.s32.totalorder %s21, 0
      %p69 = por %p67, %p68
      %s70 = ssub.s32 %s15, %s22
      %p71 = scmp.eq.s32.totalorder %s70, 0
      %s73 = sadd.s32 %s72, 1
      %s74 = scalar_select %p71, %s72, %s73
      %p77 = pneg %p71
      %p78 = scmp.eq.s32.totalorder %s15, 1
      %p79 = por %p77, %p78
      %p80 = scmp.ne.s32.totalorder %s72, %s75
      %p81 = scmp.eq.s32.totalorder %s15, 0
      %p82 = por %p80, %p81
      %p83 = scmp.ne.s32.totalorder %s72, %s75
      %p84 = scmp.eq.s32.totalorder %s20, 1
      %p85 = por %p83, %p84
      %p86 = scmp.ne.s32.totalorder %s75, %s76
      %p87 = scmp.eq.s32.totalorder %s20, 0
      %p88 = por %p86, %p87
      %p89 = scmp.ne.s32.totalorder %s75, %s76
      %p90 = scmp.eq.s32.totalorder %s21, 1
      %p91 = por %p89, %p90
      %p93 = scmp.ne.s32.totalorder %s76, %s92
      %p94 = scmp.eq.s32.totalorder %s21, 0
      %p95 = por %p93, %p94
      %p96 = scmp.le.s32.totalorder 1, %s15
      %p97 = scmp.lt.s32.totalorder %s15, 3
      %p98 = pnand %p96, %p97
      %p99 = pneg %p98
      // Predicated region
      $region9: #{cos_linear_forward.1} parent=5 // pred_check
        _
      $region10: #{cos_linear_forward.1} parent=5 // pred_check_branch
        %101 = sbr.rel (%p98) target = $region12
      $region11: #{cos_linear_forward.1} parent=5 // pred_region
        %s102 = ssub.s32 %s15, 1
        // Predicated region
        $region13: #{cos_linear_forward.1} parent=11 // pred_check
          %p103 = pneg %p36
        $region14: #{cos_linear_forward.1} parent=11 // pred_check_branch
          %105 = sbr.rel (%p103) target = $region16
        $region15: #{cos_linear_forward.1} parent=11 // pred_region
          %s107 = ssub.s32 128, 128
          %108 = vsyncadd [#allocation3], %s107
          %s110 = sshll.u32 [#allocation2], 4
          %s111 = int_to_ptr.vmem [resolvable:$true] %s110
          %113 = dma.hbm_to_vmem [thread:$0]  %s0, 128, %s111, [#allocation3]
        $region16: #{cos_linear_forward.1} parent=11 // pred_fallthru
          _
      $region12: #{cos_linear_forward.1} parent=5 // pred_fallthru
        _
      %p114 = scmp.lt.s32.totalorder %s15, 2
      // Predicated region
      $region17: #{cos_linear_forward.1} parent=5 // pred_check
        %p115 = pneg %p114
      $region18: #{cos_linear_forward.1} parent=5 // pred_check_branch
        %117 = sbr.rel (%p115) target = $region20
      $region19: #{cos_linear_forward.1} parent=5 // pred_region
        // Predicated region
        $region21: #{cos_linear_forward.1} parent=19 // pred_check
          %p118 = pneg %p56
        $region22: #{cos_linear_forward.1} parent=19 // pred_check_branch
          %120 = sbr.rel (%p118) target = $region24
        $region23: #{cos_linear_forward.1} parent=19 // pred_region
          %s121 = sand.u32 %s46, 1
          %s122 = scalar_lea.sflag [#allocation6], %s121
          %s123 = sand.u32 %s46, 1
          %s124 = smul.addr %s123, 128
          %s125 = scalar_lea.vmem [#allocation5], %s124
          %s126 = smul.u32 16, %s15
          %s128 = ssub.s32 2048, 2048
          %129 = vsyncadd %s122, %s128
          %s130 = smul.addr %s126, 128
          %s131 = scalar_lea.hbm %s1, %s130
          %s132 = sshll.u32 %s125, 4
          %s133 = int_to_ptr.vmem [resolvable:$true] %s132
          %138 = dma.hbm_to_vmem [thread:$0]  %s131, 2048, %s133, %s122, 128, 128, 8
        $region24: #{cos_linear_forward.1} parent=19 // pred_fallthru
          _
      $region20: #{cos_linear_forward.1} parent=5 // pred_fallthru
        _
      %p139 = scmp.le.s32.totalorder 1, %s15
      %p140 = scmp.lt.s32.totalorder %s15, 3
      %p141 = pnand %p139, %p140
      %p142 = pneg %p141
      // Predicated region
      $region25: #{cos_linear_forward.1} parent=5 // pred_check
        _
      $region26: #{cos_linear_forward.1} parent=5 // pred_check_branch
        %144 = sbr.rel (%p141) target = $region28
      $region27: #{cos_linear_forward.1} parent=5 // pred_region
        %s145 = ssub.s32 %s15, 1
        // Predicated region
        $region29: #{cos_linear_forward.1} parent=27 // pred_check
          %p146 = pneg %p36
        $region30: #{cos_linear_forward.1} parent=27 // pred_check_branch
          %148 = sbr.rel (%p146) target = $region32
        $region31: #{cos_linear_forward.1} parent=27 // pred_region
          %149 = dma.done [#allocation3], 128
        $region32: #{cos_linear_forward.1} parent=27 // pred_fallthru
          _
        %s150 = sand.u32 %s49, 1
        %s151 = scalar_lea.sflag [#allocation6], %s150
        %s152 = sand.u32 %s49, 1
        %s153 = smul.addr %s152, 128
        %s154 = scalar_lea.vmem [#allocation5], %s153
        // Predicated region
        $region33: #{cos_linear_forward.1} parent=27 // pred_check
          %p155 = pneg %p62
        $region34: #{cos_linear_forward.1} parent=27 // pred_check_branch
          %157 = sbr.rel (%p155) target = $region36
        $region35: #{cos_linear_forward.1} parent=27 // pred_region
          %158 = dma.done %s151, 2048
        $region36: #{cos_linear_forward.1} parent=27 // pred_fallthru
          _
        %p159 = pneg %p36
        %p160 = pneg %p33
        %s161 = sand.u32 %s49, 1
        %s162 = scalar_lea.sflag [#allocation6], %s161
        %s163 = sand.u32 %s49, 1
        %s164 = smul.addr %s163, 128
        %s165 = scalar_lea.vmem [#allocation5], %s164
        %p166 = pneg %p62
        %p167 = pneg %p59
        %p168 = pneg %p88
        %p169 = pneg %p85
        %s170 = sand.u32 %s75, 1
        %s171 = scalar_lea.sflag [#allocation4], %s170
        %s172 = sand.u32 %s75, 1
        %s173 = smul.addr %s172, 8
        %s174 = scalar_lea.vmem [#allocation7], %s173
        %s175 = smul.u32 16, %s20
        %v176 = vld [vmem:[#allocation2] sm:$0xff]
        %v177 = vld [vmem:[%s154] sm:$0xff]
        %v178 = vld [vmem:[%s154 + $0x8] sm:$0xff]
        %v179 = vld [vmem:[%s154 + $0x10] sm:$0xff]
        %v180 = vld [vmem:[%s154 + $0x18] sm:$0xff]
        %v181 = vld [vmem:[%s154 + $0x20] sm:$0xff]
        %v182 = vld [vmem:[%s154 + $0x28] sm:$0xff]
        %v183 = vld [vmem:[%s154 + $0x30] sm:$0xff]
        %v184 = vld [vmem:[%s154 + $0x38] sm:$0xff]
        %v185 = vld [vmem:[%s154 + $0x40] sm:$0xff]
        %v186 = vld [vmem:[%s154 + $0x48] sm:$0xff]
        %v187 = vld [vmem:[%s154 + $0x50] sm:$0xff]
        %v188 = vld [vmem:[%s154 + $0x58] sm:$0xff]
        %v189 = vld [vmem:[%s154 + $0x60] sm:$0xff]
        %v190 = vld [vmem:[%s154 + $0x68] sm:$0xff]
        %v191 = vld [vmem:[%s154 + $0x70] sm:$0xff]
        %v192 = vld [vmem:[%s154 + $0x78] sm:$0xff]
        %v193 = vmul.f32 %v176, %v176
        %194 = vadd.xlane.f32.xlu0 %v193
        %v195 = vpop.xlane.xlu0 %194
        %v196 = vrsqrt.pop %v195
        %v197 = vmul.f32 %v195, %v196
        %vm198 = vcmp.eq.f32.partialorder %v195, inf
        %v199 = vsel %vm198, %v195, %v197
        %vm200 = vcmp.eq.f32.partialorder %v195, 0.0
        %v201 = vand.u32 %v195, 2147483648
        %v202 = vsel %vm200, %v201, %v199
        %v203 = vadd.f32 %v202, 1e-06
        %v204 = vrcp.pop %v203
        %v205 = vmul.f32 %v177, %v177
        %v206 = vmul.f32 %v178, %v178
        %v207 = vmul.f32 %v179, %v179
        %v208 = vmul.f32 %v180, %v180
        %v209 = vmul.f32 %v181, %v181
        %v210 = vmul.f32 %v182, %v182
        %v211 = vmul.f32 %v183, %v183
        %v212 = vmul.f32 %v184, %v184
        %v213 = vmul.f32 %v185, %v185
        %v214 = vmul.f32 %v186, %v186
        %v215 = vmul.f32 %v187, %v187
        %v216 = vmul.f32 %v188, %v188
        %v217 = vmul.f32 %v189, %v189
        %v218 = vmul.f32 %v190, %v190
        %v219 = vmul.f32 %v191, %v191
        %v220 = vmul.f32 %v192, %v192
        %221 = vadd.xlane.f32.xlu0 %v205
        %v222 = vpop.xlane.xlu0 %221
        %223 = vadd.xlane.f32.xlu0 %v206
        %v224 = vpop.xlane.xlu0 %223
        %225 = vadd.xlane.f32.xlu0 %v207
        %v226 = vpop.xlane.xlu0 %225
        %227 = vadd.xlane.f32.xlu0 %v208
        %v228 = vpop.xlane.xlu0 %227
        %229 = vadd.xlane.f32.xlu0 %v209
        %v230 = vpop.xlane.xlu0 %229
        %231 = vadd.xlane.f32.xlu0 %v210
        %v232 = vpop.xlane.xlu0 %231
        %233 = vadd.xlane.f32.xlu0 %v211
        %v234 = vpop.xlane.xlu0 %233
        %235 = vadd.xlane.f32.xlu0 %v212
        %v236 = vpop.xlane.xlu0 %235
        %237 = vadd.xlane.f32.xlu0 %v213
        %v238 = vpop.xlane.xlu0 %237
        %239 = vadd.xlane.f32.xlu0 %v214
        %v240 = vpop.xlane.xlu0 %239
        %241 = vadd.xlane.f32.xlu0 %v215
        %v242 = vpop.xlane.xlu0 %241
        %243 = vadd.xlane.f32.xlu0 %v216
        %v244 = vpop.xlane.xlu0 %243
        %245 = vadd.xlane.f32.xlu0 %v217
        %v246 = vpop.xlane.xlu0 %245
        %247 = vadd.xlane.f32.xlu0 %v218
        %v248 = vpop.xlane.xlu0 %247
        %249 = vadd.xlane.f32.xlu0 %v219
        %v250 = vpop.xlane.xlu0 %249
        %251 = vadd.xlane.f32.xlu0 %v220
        %v252 = vpop.xlane.xlu0 %251
        %v253 = vrsqrt.pop %v222
        %v254 = vmul.f32 %v222, %v253
        %vm255 = vcmp.eq.f32.partialorder %v222, inf
        %v256 = vsel %vm255, %v222, %v254
        %vm257 = vcmp.eq.f32.partialorder %v222, 0.0
        %v258 = vand.u32 %v222, 2147483648
        %v259 = vsel %vm257, %v258, %v256
        %v260 = vrsqrt.pop %v224
        %v261 = vmul.f32 %v224, %v260
        %vm262 = vcmp.eq.f32.partialorder %v224, inf
        %v263 = vsel %vm262, %v224, %v261
        %vm264 = vcmp.eq.f32.partialorder %v224, 0.0
        %v265 = vand.u32 %v224, 2147483648
        %v266 = vsel %vm264, %v265, %v263
        %v267 = vrsqrt.pop %v226
        %v268 = vmul.f32 %v226, %v267
        %vm269 = vcmp.eq.f32.partialorder %v226, inf
        %v270 = vsel %vm269, %v226, %v268
        %vm271 = vcmp.eq.f32.partialorder %v226, 0.0
        %v272 = vand.u32 %v226, 2147483648
        %v273 = vsel %vm271, %v272, %v270
        %v274 = vrsqrt.pop %v228
        %v275 = vmul.f32 %v228, %v274
        %vm276 = vcmp.eq.f32.partialorder %v228, inf
        %v277 = vsel %vm276, %v228, %v275
        %vm278 = vcmp.eq.f32.partialorder %v228, 0.0
        %v279 = vand.u32 %v228, 2147483648
        %v280 = vsel %vm278, %v279, %v277
        %v281 = vrsqrt.pop %v230
        %v282 = vmul.f32 %v230, %v281
        %vm283 = vcmp.eq.f32.partialorder %v230, inf
        %v284 = vsel %vm283, %v230, %v282
        %vm285 = vcmp.eq.f32.partialorder %v230, 0.0
        %v286 = vand.u32 %v230, 2147483648
        %v287 = vsel %vm285, %v286, %v284
        %v288 = vrsqrt.pop %v232
        %v289 = vmul.f32 %v232, %v288
        %vm290 = vcmp.eq.f32.partialorder %v232, inf
        %v291 = vsel %vm290, %v232, %v289
        %vm292 = vcmp.eq.f32.partialorder %v232, 0.0
        %v293 = vand.u32 %v232, 2147483648
        %v294 = vsel %vm292, %v293, %v291
        %v295 = vrsqrt.pop %v234
        %v296 = vmul.f32 %v234, %v295
        %vm297 = vcmp.eq.f32.partialorder %v234, inf
        %v298 = vsel %vm297, %v234, %v296
        %vm299 = vcmp.eq.f32.partialorder %v234, 0.0
        %v300 = vand.u32 %v234, 2147483648
        %v301 = vsel %vm299, %v300, %v298
        %v302 = vrsqrt.pop %v236
        %v303 = vmul.f32 %v236, %v302
        %vm304 = vcmp.eq.f32.partialorder %v236, inf
        %v305 = vsel %vm304, %v236, %v303
        %vm306 = vcmp.eq.f32.partialorder %v236, 0.0
        %v307 = vand.u32 %v236, 2147483648
        %v308 = vsel %vm306, %v307, %v305
        %v309 = vrsqrt.pop %v238
        %v310 = vmul.f32 %v238, %v309
        %vm311 = vcmp.eq.f32.partialorder %v238, inf
        %v312 = vsel %vm311, %v238, %v310
        %vm313 = vcmp.eq.f32.partialorder %v238, 0.0
        %v314 = vand.u32 %v238, 2147483648
        %v315 = vsel %vm313, %v314, %v312
        %v316 = vrsqrt.pop %v240
        %v317 = vmul.f32 %v240, %v316
        %vm318 = vcmp.eq.f32.partialorder %v240, inf
        %v319 = vsel %vm318, %v240, %v317
        %vm320 = vcmp.eq.f32.partialorder %v240, 0.0
        %v321 = vand.u32 %v240, 2147483648
        %v322 = vsel %vm320, %v321, %v319
        %v323 = vrsqrt.pop %v242
        %v324 = vmul.f32 %v242, %v323
        %vm325 = vcmp.eq.f32.partialorder %v242, inf
        %v326 = vsel %vm325, %v242, %v324
        %vm327 = vcmp.eq.f32.partialorder %v242, 0.0
        %v328 = vand.u32 %v242, 2147483648
        %v329 = vsel %vm327, %v328, %v326
        %v330 = vrsqrt.pop %v244
        %v331 = vmul.f32 %v244, %v330
        %vm332 = vcmp.eq.f32.partialorder %v244, inf
        %v333 = vsel %vm332, %v244, %v331
        %vm334 = vcmp.eq.f32.partialorder %v244, 0.0
        %v335 = vand.u32 %v244, 2147483648
        %v336 = vsel %vm334, %v335, %v333
        %v337 = vrsqrt.pop %v246
        %v338 = vmul.f32 %v246, %v337
        %vm339 = vcmp.eq.f32.partialorder %v246, inf
        %v340 = vsel %vm339, %v246, %v338
        %vm341 = vcmp.eq.f32.partialorder %v246, 0.0
        %v342 = vand.u32 %v246, 2147483648
        %v343 = vsel %vm341, %v342, %v340
        %v344 = vrsqrt.pop %v248
        %v345 = vmul.f32 %v248, %v344
        %vm346 = vcmp.eq.f32.partialorder %v248, inf
        %v347 = vsel %vm346, %v248, %v345
        %vm348 = vcmp.eq.f32.partialorder %v248, 0.0
        %v349 = vand.u32 %v248, 2147483648
        %v350 = vsel %vm348, %v349, %v347
        %v351 = vrsqrt.pop %v250
        %v352 = vmul.f32 %v250, %v351
        %vm353 = vcmp.eq.f32.partialorder %v250, inf
        %v354 = vsel %vm353, %v250, %v352
        %vm355 = vcmp.eq.f32.partialorder %v250, 0.0
        %v356 = vand.u32 %v250, 2147483648
        %v357 = vsel %vm355, %v356, %v354
        %v358 = vrsqrt.pop %v252
        %v359 = vmul.f32 %v252, %v358
        %vm360 = vcmp.eq.f32.partialorder %v252, inf
        %v361 = vsel %vm360, %v252, %v359
        %vm362 = vcmp.eq.f32.partialorder %v252, 0.0
        %v363 = vand.u32 %v252, 2147483648
        %v364 = vsel %vm362, %v363, %v361
        %v365 = vadd.f32 %v259, 1e-06
        %v366 = vadd.f32 %v266, 1e-06
        %v367 = vadd.f32 %v273, 1e-06
        %v368 = vadd.f32 %v280, 1e-06
        %v369 = vadd.f32 %v287, 1e-06
        %v370 = vadd.f32 %v294, 1e-06
        %v371 = vadd.f32 %v301, 1e-06
        %v372 = vadd.f32 %v308, 1e-06
        %v373 = vadd.f32 %v315, 1e-06
        %v374 = vadd.f32 %v322, 1e-06
        %v375 = vadd.f32 %v329, 1e-06
        %v376 = vadd.f32 %v336, 1e-06
        %v377 = vadd.f32 %v343, 1e-06
        %v378 = vadd.f32 %v350, 1e-06
        %v379 = vadd.f32 %v357, 1e-06
        %v380 = vadd.f32 %v364, 1e-06
        %v381 = vrcp.pop %v365
        %v382 = vrcp.pop %v366
        %v383 = vrcp.pop %v367
        %v384 = vrcp.pop %v368
        %v385 = vrcp.pop %v369
        %v386 = vrcp.pop %v370
        %v387 = vrcp.pop %v371
        %v388 = vrcp.pop %v372
        %v389 = vrcp.pop %v373
        %v390 = vrcp.pop %v374
        %v391 = vrcp.pop %v375
        %v392 = vrcp.pop %v376
        %v393 = vrcp.pop %v377
        %v394 = vrcp.pop %v378
        %v395 = vrcp.pop %v379
        %v396 = vrcp.pop %v380
        %v397 = vmul.f32 %v176, %v204
        %v398 = vmul.f32 %v177, %v381
        %v399 = vmul.f32 %v178, %v382
        %v400 = vmul.f32 %v179, %v383
        %v401 = vmul.f32 %v180, %v384
        %v402 = vmul.f32 %v181, %v385
        %v403 = vmul.f32 %v182, %v386
        %v404 = vmul.f32 %v183, %v387
        %v405 = vmul.f32 %v184, %v388
        %v406 = vmul.f32 %v185, %v389
        %v407 = vmul.f32 %v186, %v390
        %v408 = vmul.f32 %v187, %v391
        %v409 = vmul.f32 %v188, %v392
        %v410 = vmul.f32 %v189, %v393
        %v411 = vmul.f32 %v190, %v394
        %v412 = vmul.f32 %v191, %v395
        %v413 = vmul.f32 %v192, %v396
        %414 = vmatprep.subr.mxu0 0.0
        %415 = vmatpush1.xpose.msra.mxu0 %v398
        %416 = vmatprep.subr.mxu0 0.0
        %417 = vmatpush1.xpose.msra.mxu0 %v399
        %418 = vmatprep.subr.mxu0 0.0
        %419 = vmatpush1.xpose.msra.mxu0 %v400
        %420 = vmatprep.subr.mxu0 0.0
        %421 = vmatpush1.xpose.msra.mxu0 %v401
        %422 = vmatprep.subr.mxu0 0.0
        %423 = vmatpush1.xpose.msra.mxu0 %v402
        %424 = vmatprep.subr.mxu0 0.0
        %425 = vmatpush1.xpose.msra.mxu0 %v403
        %426 = vmatprep.subr.mxu0 0.0
        %427 = vmatpush1.xpose.msra.mxu0 %v404
        %428 = vmatprep.subr.mxu0 0.0
        %429 = vmatpush1.xpose.msra.mxu0 %v405
        %430 = vmatprep.subr.mxu0 0.0
        %431 = vmatpush1.xpose.msra.mxu0 %v406
        %432 = vmatprep.subr.mxu0 0.0
        %433 = vmatpush1.xpose.msra.mxu0 %v407
        %434 = vmatprep.subr.mxu0 0.0
        %435 = vmatpush1.xpose.msra.mxu0 %v408
        %436 = vmatprep.subr.mxu0 0.0
        %437 = vmatpush1.xpose.msra.mxu0 %v409
        %438 = vmatprep.subr.mxu0 0.0
        %439 = vmatpush1.xpose.msra.mxu0 %v410
        %440 = vmatprep.subr.mxu0 0.0
        %441 = vmatpush1.xpose.msra.mxu0 %v411
        %442 = vmatprep.subr.mxu0 0.0
        %443 = vmatpush1.xpose.msra.mxu0 %v412
        %444 = vmatprep.subr.mxu0 0.0
        %445 = vmatpush1.xpose.msra.mxu0 %v413
        %446 = vmatprep.subr.mxu0 0.0
        %447 = vmatpush1.xpose.msra.mxu0 0.0
        %448 = vmatprep.subr.mxu0 0.0
        %449 = vmatpush1.xpose.msra.mxu0 0.0
        %450 = vmatprep.subr.mxu0 0.0
        %451 = vmatpush1.xpose.msra.mxu0 0.0
        %452 = vmatprep.subr.mxu0 0.0
        %453 = vmatpush1.xpose.msra.mxu0 0.0
        %454 = vmatprep.subr.mxu0 0.0
        %455 = vmatpush1.xpose.msra.mxu0 0.0
        %456 = vmatprep.subr.mxu0 0.0
        %457 = vmatpush1.xpose.msra.mxu0 0.0
        %458 = vmatprep.subr.mxu0 0.0
        %459 = vmatpush1.xpose.msra.mxu0 0.0
        %460 = vmatprep.subr.mxu0 0.0
        %461 = vmatpush1.xpose.msra.mxu0 0.0
        %462 = vmatprep.subr.mxu0 0.0
        %463 = vmatpush1.xpose.msra.mxu0 0.0
        %464 = vmatprep.subr.mxu0 0.0
        %465 = vmatpush1.xpose.msra.mxu0 0.0
        %466 = vmatprep.subr.mxu0 0.0
        %467 = vmatpush1.xpose.msra.mxu0 0.0
        %468 = vmatprep.subr.mxu0 0.0
        %469 = vmatpush1.xpose.msra.mxu0 0.0
        %470 = vmatprep.subr.mxu0 0.0
        %471 = vmatpush1.xpose.msra.mxu0 0.0
        %472 = vmatprep.subr.mxu0 0.0
        %473 = vmatpush1.xpose.msra.mxu0 0.0
        %474 = vmatprep.subr.mxu0 0.0
        %475 = vmatpush1.xpose.msra.mxu0 0.0
        %476 = vmatprep.subr.mxu0 0.0
        %477 = vmatpush1.xpose.msra.mxu0 0.0
        %478 = vmatprep.mubr.f32.mxu0 0.0
        %479 = vmatmul.mubr.f32.gmra.mrb[0].mxu0 %v397
        %v480 = vpop.f32.mrb[0].mxu0
        %v481 = vadd.f32 0.0, %v480
        %v482 = vpop.f32.mrb[0].mxu0
        %483 = vdwg.mxu0
        %v484 = vmul.f32 %v481, 11.111111
        %485 = vst [vmem:[%s174] sm:$0xff] %v484
        %s486 = sand.u32 %s75, 1
        %s487 = scalar_lea.sflag [#allocation4], %s486
        %s488 = sand.u32 %s75, 1
        %s489 = smul.addr %s488, 8
        %s490 = scalar_lea.vmem [#allocation7], %s489
        // Predicated region
        $region37: #{cos_linear_forward.1} parent=27 // pred_check
          %p491 = pneg %p85
        $region38: #{cos_linear_forward.1} parent=27 // pred_check_branch
          %493 = sbr.rel (%p491) target = $region40
        $region39: #{cos_linear_forward.1} parent=27 // pred_region
          %s495 = ssub.s32 128, 128
          %496 = vsyncadd %s487, %s495
          %s497 = smul.addr %s20, 128
          %s498 = scalar_lea.hbm %s2, %s497
          %s500 = sshll.u32 %s490, 4
          %s501 = int_to_ptr.vmem [resolvable:$true] %s500
          %503 = dma.vmem_to_hbm [thread:$0]  %s501, 128, %s498, %s487
        $region40: #{cos_linear_forward.1} parent=27 // pred_fallthru
          _
      $region28: #{cos_linear_forward.1} parent=5 // pred_fallthru
        _
      %p504 = scmp.le.s32.totalorder 2, %s15
      // Predicated region
      $region41: #{cos_linear_forward.1} parent=5 // pred_check
        %p505 = pneg %p504
      $region42: #{cos_linear_forward.1} parent=5 // pred_check_branch
        %507 = sbr.rel (%p505) target = $region44
      $region43: #{cos_linear_forward.1} parent=5 // pred_region
        %s508 = ssub.s32 %s15, 2
        // Predicated region
        $region45: #{cos_linear_forward.1} parent=43 // pred_check
          %p509 = pneg %p91
        $region46: #{cos_linear_forward.1} parent=43 // pred_check_branch
          %511 = sbr.rel (%p509) target = $region48
        $region47: #{cos_linear_forward.1} parent=43 // pred_region
          %s512 = sand.u32 %s76, 1
          %s513 = scalar_lea.sflag [#allocation4], %s512
          %s514 = sand.u32 %s76, 1
          %s515 = smul.addr %s514, 8
          %s516 = scalar_lea.vmem [#allocation7], %s515
          %517 = dma.done %s513, 128
        $region48: #{cos_linear_forward.1} parent=43 // pred_fallthru
          _
      $region44: #{cos_linear_forward.1} parent=5 // pred_fallthru
        _
    $region6: #{cos_linear_forward.1} parent=1 // loop_footer
      %s19 = sadd.s32 1, %s15
    $region7: #{cos_linear_forward.1} parent=1 // loop_footer_branch
      %14 = sbr.rel target = $region3
    $region8: #{cos_linear_forward.1} parent=1 // loop_exit
      _
    %518 = vsyncpa [#allocation3], 1
    %s519 = scalar_lea.sflag [#allocation3], 1
    %520 = vsyncpa %s519, 1
    %521 = vsyncpa [#allocation6], 1
    %s522 = scalar_lea.sflag [#allocation6], 1
    %523 = vsyncpa %s522, 1
    %524 = vsyncpa [#allocation4], 1
    %s525 = scalar_lea.sflag [#allocation4], 1
    %526 = vsyncpa %s525, 1

</llo_original>
